<compile_context>
chip_gen: v6e
topology: v6e:2x2x1
jax: 0.10.0
libtpu: 0.0.40
codegen_flags: <defaults>
</compile_context>

<pallas_src>
import functools
import math

import jax
import jax.numpy as jnp
from jax.experimental import pallas as pl
from jax.experimental.pallas import tpu as pltpu

_SUBLANE = 8


def _round_up(v, m):
    return ((v + m - 1) // m) * m


# -----------------------------------------------------------------------------
# Fused kernel: timestep embedding + time MLP + split-concat first layer +
# stacked Linear/LeakyReLU layers, all resident on-chip for one batch tile.
# -----------------------------------------------------------------------------
def _fused_mlp_kernel(*refs, time_dim, th, hidden, out0, output_dim,
                      n_mid, has_last):
    f32 = jnp.float32
    bf16 = jnp.bfloat16

    x_ref, t_ref, aux_ref, tw0_ref, tw1_ref, w0x_ref, w0t_ref = refs[:7]
    pos = 7
    wmid_ref = None
    if n_mid > 0:
        wmid_ref = refs[pos]
        pos += 1
    wlast_ref = None
    if has_last:
        wlast_ref = refs[pos]
        pos += 1
    o_ref = refs[pos]

    # Tiny packed table: row0=freqs, row1=phase, rows 2.. = biases (f32).
    aux = aux_ref[...]
    freqs = aux[0:1, :time_dim]          # [1, time_dim]
    phase = aux[1:2, :time_dim]          # 0 for cos half, -pi/2 for sin half

    # ---- sinusoidal timestep embedding, single transcendental per lane:
    #      cos(t*w) for the first half, cos(t*w - pi/2) == sin(t*w) for the
    #      second half.  (Odd-dim / padded columns are handled by zeroed
    #      weight rows of time_w0, no extra masking needed.)
    args = t_ref[...] * freqs + phase    # [TILE_B,1]*[1,td] -> [TILE_B, td]
    emb = jnp.cos(args)                  # EUP

    # ---- TimeEmbedding.mlp: Linear -> SiLU -> Linear (bf16 MXU, f32 accum)
    h = jnp.dot(emb.astype(bf16), tw0_ref[...],
                preferred_element_type=f32) + aux[2:3, :th]
    h = h * jax.nn.sigmoid(h)            # SiLU in f32 (EUP)
    t_emb = jnp.dot(h.astype(bf16), tw1_ref[...],
                    preferred_element_type=f32) + aux[3:4, :time_dim]

    # ---- main net, first layer with the concat eliminated:
    #      [x, t_emb] @ W0 == x @ W0[:in] + t_emb @ W0[in:]
    out = (jnp.dot(x_ref[...].astype(bf16), w0x_ref[...],
                   preferred_element_type=f32)
           + jnp.dot(t_emb.astype(bf16), w0t_ref[...],
                     preferred_element_type=f32)
           + aux[4:5, :out0])
    if has_last:                                         # layer 0 is not last
        out = jnp.where(out >= 0.0, out, 0.01 * out)     # LeakyReLU(0.01)

    # ---- middle layers (hidden -> hidden), weights stacked in one ref
    for li in range(n_mid):
        w = wmid_ref[li]                                 # [hidden, hidden] bf16
        out = (jnp.dot(out.astype(bf16), w, preferred_element_type=f32)
               + aux[5 + li:6 + li, :hidden])
        out = jnp.where(out >= 0.0, out, 0.01 * out)

    # ---- last layer (hidden -> output_dim), no activation
    if has_last:
        out = (jnp.dot(out.astype(bf16), wlast_ref[...],
                       preferred_element_type=f32)
               + aux[5 + n_mid:6 + n_mid, :output_dim])

    o_ref[...] = out.astype(o_ref.dtype)


# -----------------------------------------------------------------------------
# Parameter init (matches init_weights: truncated normal, std=1/(2*sqrt(in)),
# truncated at +/- 2*std, bias = 0).  Weights stored in bf16 (MXU fast path),
# biases + sinusoidal freq/phase packed into one small f32 "aux" table.
# -----------------------------------------------------------------------------
def make_mlp_params(key, input_dim, hidden_size, output_dim, num_layers,
                    time_embed_hidden_size, time_dim, max_period=10000.0):
    th = time_embed_hidden_size
    n_mid = max(num_layers - 1, 0)
    has_last = num_layers >= 1
    out0 = hidden_size if has_last else output_dim

    keys = jax.random.split(key, 3 + n_mid + (1 if has_last else 0))

    def trunc(k, shape, in_dim):
        std = 1.0 / (2.0 * math.sqrt(in_dim))
        return jax.random.truncated_normal(k, -2.0, 2.0, shape, jnp.float32) * std

    params = {}

    tw0 = trunc(keys[0], (time_dim, th), time_dim)
    if time_dim % 2 == 1:
        # The last embedding column is identically zero in the reference, so
        # its weight row never contributes; zero it so the kernel needs no mask.
        tw0 = tw0.at[time_dim - 1].set(0.0)
    params["time_w0"] = tw0.astype(jnp.bfloat16)
    params["time_w1"] = trunc(keys[1], (th, time_dim), th).astype(jnp.bfloat16)

    in0 = input_dim + time_dim
    w0 = trunc(keys[2], (in0, out0), in0)
    params["net_w0_x"] = w0[:input_dim].astype(jnp.bfloat16)
    params["net_w0_t"] = w0[input_dim:].astype(jnp.bfloat16)

    kpos = 3
    if n_mid > 0:
        wmid = jnp.stack(
            [trunc(keys[kpos + i], (hidden_size, hidden_size), hidden_size)
             for i in range(n_mid)], axis=0)
        params["w_mid"] = wmid.astype(jnp.bfloat16)
        kpos += n_mid
    if has_last:
        params["w_last"] = trunc(keys[kpos], (hidden_size, output_dim),
                                 hidden_size).astype(jnp.bfloat16)

    # aux table: row0=freqs, row1=phase, row2=time_b0, row3=time_b1, row4=b0,
    # rows 5..5+n_mid-1 = mid biases, row 5+n_mid = b_last.  Biases init to 0.
    widths = ([time_dim, time_dim, th, time_dim, out0]
              + [hidden_size] * n_mid + ([output_dim] if has_last else []))
    bw = max(widths)
    aux = jnp.zeros((len(widths), bw), jnp.float32)

    half = time_dim // 2
    j = jnp.arange(time_dim)
    k = jnp.where(j < half, j, j - half).astype(jnp.float32)
    freqs = jnp.exp((-math.log(max_period) / half) * k)
    freqs = jnp.where(j < 2 * half, freqs, 0.0)          # odd time_dim column
    phase = jnp.where(j < half, 0.0, -math.pi / 2.0)     # sin(x)=cos(x-pi/2)
    phase = jnp.where(j < 2 * half, phase, 0.0)
    aux = aux.at[0, :time_dim].set(freqs)
    aux = aux.at[1, :time_dim].set(phase)
    params["aux"] = aux
    return params


# -----------------------------------------------------------------------------
# Forward builder: returns a jitted forward(params, x, time)
# -----------------------------------------------------------------------------
def build_mlp_forward(input_dim, hidden_size, output_dim, num_layers,
                      time_embed_hidden_size, time_dim):
    th = time_embed_hidden_size
    n_mid = max(num_layers - 1, 0)
    has_last = num_layers >= 1
    out0 = hidden_size if has_last else output_dim

    kernel = functools.partial(
        _fused_mlp_kernel,
        time_dim=time_dim, th=th, hidden=hidden_size, out0=out0,
        output_dim=output_dim, n_mid=n_mid, has_last=has_last)

    def forward(params, x, time):
        if time.ndim == 0:
            time = time[None]
        B = x.shape[0]
        TILE_B = _round_up(B, _SUBLANE) if B <= 512 else 256
        B_P = _round_up(B, TILE_B)

        x_in = x.astype(jnp.float32)
        t_in = time.astype(jnp.float32).reshape(-1, 1)
        if B_P != B:                           # only pad the batch when needed
            x_in = jnp.pad(x_in, ((0, B_P - B), (0, 0)))
            t_in = jnp.pad(t_in, ((0, B_P - B), (0, 0)))

        weights = [params["aux"], params["time_w0"], params["time_w1"],
                   params["net_w0_x"], params["net_w0_t"]]
        if n_mid > 0:
            weights.append(params["w_mid"])
        if has_last:
            weights.append(params["w_last"])

        def rep_spec(a):                       # whole array, resident in VMEM
            zeros = (0,) * a.ndim
            return pl.BlockSpec(a.shape, lambda i, _z=zeros: _z)

        in_specs = ([pl.BlockSpec((TILE_B, input_dim), lambda i: (i, 0)),
                     pl.BlockSpec((TILE_B, 1), lambda i: (i, 0))]
                    + [rep_spec(a) for a in weights])
        out_specs = pl.BlockSpec((TILE_B, output_dim), lambda i: (i, 0))

        # VMEM budget: resident weights + double-buffered IO tiles + margin,
        # capped at 64 MiB so the plan also fits v7x physical VMEM.
        weight_bytes = sum(int(a.size) * a.dtype.itemsize for a in weights)
        io_bytes = TILE_B * (input_dim + 1 + output_dim) * 4
        vmem_limit = int(min(max(2 * (weight_bytes + io_bytes) + (8 << 20),
                                 32 << 20), 64 << 20))

        out_p = pl.pallas_call(
            kernel,
            out_shape=jax.ShapeDtypeStruct((B_P, output_dim), jnp.float32),
            grid=(B_P // TILE_B,),
            in_specs=in_specs,
            out_specs=out_specs,
            compiler_params=pltpu.CompilerParams(
                dimension_semantics=("parallel",),
                vmem_limit_bytes=vmem_limit),
        )(x_in, t_in, *weights)
        return out_p[:B] if B_P != B else out_p

    return jax.jit(forward)


# -----------------------------------------------------------------------------
# Pure-JAX reference (mirrors the PyTorch module, using the same bf16 weights
# and bf16 matmul inputs with f32 accumulation) for a correctness check.
# -----------------------------------------------------------------------------
def _reference_forward(params, x, time, cfg):
    (input_dim, hidden_size, output_dim, num_layers, th, time_dim) = cfg
    f32, bf16 = jnp.float32, jnp.bfloat16
    n_mid = max(num_layers - 1, 0)
    has_last = num_layers >= 1
    out0 = hidden_size if has_last else output_dim
    aux = params["aux"]

    half = time_dim // 2
    freqs = jnp.exp(-math.log(10000.0) * jnp.arange(half, dtype=f32) / half)
    args = time.astype(f32)[:, None] * freqs[None, :]
    emb = jnp.concatenate([jnp.cos(args), jnp.sin(args)], axis=-1)
    if time_dim % 2 == 1:
        emb = jnp.concatenate([emb, jnp.zeros_like(emb[:, :1])], axis=-1)

    h = jnp.dot(emb.astype(bf16), params["time_w0"],
                preferred_element_type=f32) + aux[2, :th]
    h = h * jax.nn.sigmoid(h)
    t_emb = jnp.dot(h.astype(bf16), params["time_w1"],
                    preferred_element_type=f32) + aux[3, :time_dim]

    w0 = jnp.concatenate([params["net_w0_x"], params["net_w0_t"]], axis=0)
    cat = jnp.concatenate([x.astype(f32), t_emb], axis=-1)
    out = jnp.dot(cat.astype(bf16), w0, preferred_element_type=f32) + aux[4, :out0]
    if has_last:
        out = jnp.where(out >= 0, out, 0.01 * out)
    for li in range(n_mid):
        out = (jnp.dot(out.astype(bf16), params["w_mid"][li],
                       preferred_element_type=f32) + aux[5 + li, :hidden_size])
        out = jnp.where(out >= 0, out, 0.01 * out)
    if has_last:
        out = (jnp.dot(out.astype(bf16), params["w_last"],
                       preferred_element_type=f32)
               + aux[5 + n_mid, :output_dim])
    return out


# -----------------------------------------------------------------------------
if __name__ == "__main__":
    # small shapes consistent with the module's "toy example" usage
    batch = 2
    input_dim = 8
    hidden_size = 32
    output_dim = 4
    num_layers = 2
    time_embed_hidden_size = 32
    time_dim = 32

    key = jax.random.PRNGKey(0)
    pkey, xkey, tkey = jax.random.split(key, 3)

    params = make_mlp_params(pkey, input_dim, hidden_size, output_dim,
                             num_layers, time_embed_hidden_size, time_dim)
    forward = build_mlp_forward(input_dim, hidden_size, output_dim, num_layers,
                                time_embed_hidden_size, time_dim)

    x = jax.random.normal(xkey, (batch, input_dim), jnp.float32)
    time = jax.random.randint(tkey, (batch,), 0, 1000).astype(jnp.float32)

    out = forward(params, x, time)
    jax.block_until_ready(out)

    assert out.shape == (batch, output_dim)
    assert out.dtype == jnp.float32

    ref = _reference_forward(params, x, time,
                             (input_dim, hidden_size, output_dim, num_layers,
                              time_embed_hidden_size, time_dim))
    # Tolerance covers f32 rounding-order differences (split first layer,
    # single-cos sin trick); both paths use identical bf16 MXU matmuls.
    assert jnp.allclose(out, ref, atol=5e-3, rtol=5e-3), (out, ref)

    print("KERNEL_OK")
</pallas_src>

<mosaic_0001>
module attributes {stable_mosaic.version = 11 : i64} {
  func.func @_fused_mlp_kernel(%arg0: i32, %arg1: memref<8x8xf32, #tpu.memory_space<vmem>>, %arg2: memref<8x1xf32, #tpu.memory_space<vmem>>, %arg3: memref<7x32xf32, #tpu.memory_space<vmem>>, %arg4: memref<32x32xbf16, #tpu.memory_space<vmem>>, %arg5: memref<32x32xbf16, #tpu.memory_space<vmem>>, %arg6: memref<8x32xbf16, #tpu.memory_space<vmem>>, %arg7: memref<32x32xbf16, #tpu.memory_space<vmem>>, %arg8: memref<1x32x32xbf16, #tpu.memory_space<vmem>>, %arg9: memref<32x4xbf16, #tpu.memory_space<vmem>>, %arg10: memref<8x4xf32, #tpu.memory_space<vmem>>) attributes {dimension_semantics = [#tpu.dimension_semantics<parallel>], iteration_bounds = array<i64: 1>, scalar_prefetch = 0 : i64, scratch_operands = 0 : i64, tpu.core_type = #tpu.core_type<tc>, window_params = [{transform_indices = @transform_0, window_bounds = array<i64: 8, 8>}, {transform_indices = @transform_1, window_bounds = array<i64: 8, 1>}, {pipeline_mode = #tpu.pipeline_mode<synchronous>, transform_indices = @transform_2, window_bounds = array<i64: 7, 32>}, {pipeline_mode = #tpu.pipeline_mode<synchronous>, transform_indices = @transform_3, window_bounds = array<i64: 32, 32>}, {pipeline_mode = #tpu.pipeline_mode<synchronous>, transform_indices = @transform_4, window_bounds = array<i64: 32, 32>}, {pipeline_mode = #tpu.pipeline_mode<synchronous>, transform_indices = @transform_5, window_bounds = array<i64: 8, 32>}, {pipeline_mode = #tpu.pipeline_mode<synchronous>, transform_indices = @transform_6, window_bounds = array<i64: 32, 32>}, {pipeline_mode = #tpu.pipeline_mode<synchronous>, transform_indices = @transform_7, window_bounds = array<i64: 1, 32, 32>}, {pipeline_mode = #tpu.pipeline_mode<synchronous>, transform_indices = @transform_8, window_bounds = array<i64: 32, 4>}, {transform_indices = @transform_9, window_bounds = array<i64: 8, 4>}]} {
    %c0 = arith.constant 0 : index
    %c0_0 = arith.constant 0 : index
    %0 = vector.load %arg3[%c0, %c0_0] : memref<7x32xf32, #tpu.memory_space<vmem>>, vector<7x32xf32>
    %1 = vector.extract_strided_slice %0 {offsets = [0, 0], sizes = [1, 32], strides = [1, 1]} : vector<7x32xf32> to vector<1x32xf32>
    %2 = vector.extract_strided_slice %0 {offsets = [1, 0], sizes = [1, 32], strides = [1, 1]} : vector<7x32xf32> to vector<1x32xf32>
    %c0_1 = arith.constant 0 : index
    %c0_2 = arith.constant 0 : index
    %3 = vector.load %arg2[%c0_1, %c0_2] : memref<8x1xf32, #tpu.memory_space<vmem>>, vector<8x1xf32>
    %4 = vector.broadcast %3 : vector<8x1xf32> to vector<8x32xf32>
    %5 = vector.broadcast %1 : vector<1x32xf32> to vector<8x32xf32>
    %6 = arith.mulf %4, %5 : vector<8x32xf32>
    %7 = vector.broadcast %2 : vector<1x32xf32> to vector<8x32xf32>
    %8 = arith.addf %6, %7 : vector<8x32xf32>
    %9 = math.cos %8 : vector<8x32xf32>
    %10 = arith.truncf %9 : vector<8x32xf32> to vector<8x32xbf16>
    %c0_3 = arith.constant 0 : index
    %c0_4 = arith.constant 0 : index
    %11 = vector.load %arg4[%c0_3, %c0_4] : memref<32x32xbf16, #tpu.memory_space<vmem>>, vector<32x32xbf16>
    %cst = arith.constant dense<0.000000e+00> : vector<8x32xf32>
    %12 = tpu.matmul %10, %11, %cst {dimension_numbers = #tpu.dot_dimension_numbers<[1], [0], [0], [1], [0, 0, 1, 1], [], []>} : vector<8x32xbf16>, vector<32x32xbf16>, vector<8x32xf32> -> vector<8x32xf32>
    %13 = vector.extract_strided_slice %0 {offsets = [2, 0], sizes = [1, 32], strides = [1, 1]} : vector<7x32xf32> to vector<1x32xf32>
    %14 = vector.broadcast %13 : vector<1x32xf32> to vector<8x32xf32>
    %15 = arith.addf %12, %14 : vector<8x32xf32>
    %16 = arith.negf %15 : vector<8x32xf32>
    %17 = math.exp %16 : vector<8x32xf32>
    %cst_5 = arith.constant 1.000000e+00 : f32
    %18 = vector.broadcast %cst_5 : f32 to vector<8x32xf32>
    %19 = arith.addf %18, %17 : vector<8x32xf32>
    %20 = arith.divf %18, %19 : vector<8x32xf32>
    %21 = arith.mulf %15, %20 : vector<8x32xf32>
    %22 = arith.truncf %21 : vector<8x32xf32> to vector<8x32xbf16>
    %c0_6 = arith.constant 0 : index
    %c0_7 = arith.constant 0 : index
    %23 = vector.load %arg5[%c0_6, %c0_7] : memref<32x32xbf16, #tpu.memory_space<vmem>>, vector<32x32xbf16>
    %cst_8 = arith.constant dense<0.000000e+00> : vector<8x32xf32>
    %24 = tpu.matmul %22, %23, %cst_8 {dimension_numbers = #tpu.dot_dimension_numbers<[1], [0], [0], [1], [0, 0, 1, 1], [], []>} : vector<8x32xbf16>, vector<32x32xbf16>, vector<8x32xf32> -> vector<8x32xf32>
    %25 = vector.extract_strided_slice %0 {offsets = [3, 0], sizes = [1, 32], strides = [1, 1]} : vector<7x32xf32> to vector<1x32xf32>
    %26 = vector.broadcast %25 : vector<1x32xf32> to vector<8x32xf32>
    %27 = arith.addf %24, %26 : vector<8x32xf32>
    %c0_9 = arith.constant 0 : index
    %c0_10 = arith.constant 0 : index
    %28 = vector.load %arg1[%c0_9, %c0_10] : memref<8x8xf32, #tpu.memory_space<vmem>>, vector<8x8xf32>
    %29 = arith.truncf %28 : vector<8x8xf32> to vector<8x8xbf16>
    %c0_11 = arith.constant 0 : index
    %c0_12 = arith.constant 0 : index
    %30 = vector.load %arg6[%c0_11, %c0_12] : memref<8x32xbf16, #tpu.memory_space<vmem>>, vector<8x32xbf16>
    %cst_13 = arith.constant dense<0.000000e+00> : vector<8x32xf32>
    %31 = tpu.matmul %29, %30, %cst_13 {dimension_numbers = #tpu.dot_dimension_numbers<[1], [0], [0], [1], [0, 0, 1, 1], [], []>} : vector<8x8xbf16>, vector<8x32xbf16>, vector<8x32xf32> -> vector<8x32xf32>
    %32 = arith.truncf %27 : vector<8x32xf32> to vector<8x32xbf16>
    %c0_14 = arith.constant 0 : index
    %c0_15 = arith.constant 0 : index
    %33 = vector.load %arg7[%c0_14, %c0_15] : memref<32x32xbf16, #tpu.memory_space<vmem>>, vector<32x32xbf16>
    %cst_16 = arith.constant dense<0.000000e+00> : vector<8x32xf32>
    %34 = tpu.matmul %32, %33, %cst_16 {dimension_numbers = #tpu.dot_dimension_numbers<[1], [0], [0], [1], [0, 0, 1, 1], [], []>} : vector<8x32xbf16>, vector<32x32xbf16>, vector<8x32xf32> -> vector<8x32xf32>
    %35 = arith.addf %31, %34 : vector<8x32xf32>
    %36 = vector.extract_strided_slice %0 {offsets = [4, 0], sizes = [1, 32], strides = [1, 1]} : vector<7x32xf32> to vector<1x32xf32>
    %37 = vector.broadcast %36 : vector<1x32xf32> to vector<8x32xf32>
    %38 = arith.addf %35, %37 : vector<8x32xf32>
    %cst_17 = arith.constant 0.000000e+00 : f32
    %39 = vector.broadcast %cst_17 : f32 to vector<8x32xf32>
    %40 = arith.cmpf oge, %38, %39 : vector<8x32xf32>
    %cst_18 = arith.constant 0.00999999977 : f32
    %41 = vector.broadcast %cst_18 : f32 to vector<8x32xf32>
    %42 = arith.mulf %41, %38 : vector<8x32xf32>
    %43 = arith.select %40, %38, %42 : vector<8x32xi1>, vector<8x32xf32>
    %c0_19 = arith.constant 0 : index
    %c0_20 = arith.constant 0 : index
    %c0_21 = arith.constant 0 : index
    %44 = vector.load %arg8[%c0_19, %c0_20, %c0_21] : memref<1x32x32xbf16, #tpu.memory_space<vmem>>, vector<1x32x32xbf16>
    %45 = vector.shape_cast %44 : vector<1x32x32xbf16> to vector<32x32xbf16>
    %46 = arith.truncf %43 : vector<8x32xf32> to vector<8x32xbf16>
    %cst_22 = arith.constant dense<0.000000e+00> : vector<8x32xf32>
    %47 = tpu.matmul %46, %45, %cst_22 {dimension_numbers = #tpu.dot_dimension_numbers<[1], [0], [0], [1], [0, 0, 1, 1], [], []>} : vector<8x32xbf16>, vector<32x32xbf16>, vector<8x32xf32> -> vector<8x32xf32>
    %48 = vector.extract_strided_slice %0 {offsets = [5, 0], sizes = [1, 32], strides = [1, 1]} : vector<7x32xf32> to vector<1x32xf32>
    %49 = vector.broadcast %48 : vector<1x32xf32> to vector<8x32xf32>
    %50 = arith.addf %47, %49 : vector<8x32xf32>
    %cst_23 = arith.constant 0.000000e+00 : f32
    %51 = vector.broadcast %cst_23 : f32 to vector<8x32xf32>
    %52 = arith.cmpf oge, %50, %51 : vector<8x32xf32>
    %cst_24 = arith.constant 0.00999999977 : f32
    %53 = vector.broadcast %cst_24 : f32 to vector<8x32xf32>
    %54 = arith.mulf %53, %50 : vector<8x32xf32>
    %55 = arith.select %52, %50, %54 : vector<8x32xi1>, vector<8x32xf32>
    %56 = arith.truncf %55 : vector<8x32xf32> to vector<8x32xbf16>
    %c0_25 = arith.constant 0 : index
    %c0_26 = arith.constant 0 : index
    %57 = vector.load %arg9[%c0_25, %c0_26] : memref<32x4xbf16, #tpu.memory_space<vmem>>, vector<32x4xbf16>
    %cst_27 = arith.constant dense<0.000000e+00> : vector<8x4xf32>
    %58 = tpu.matmul %56, %57, %cst_27 {dimension_numbers = #tpu.dot_dimension_numbers<[1], [0], [0], [1], [0, 0, 1, 1], [], []>} : vector<8x32xbf16>, vector<32x4xbf16>, vector<8x4xf32> -> vector<8x4xf32>
    %59 = vector.extract_strided_slice %0 {offsets = [6, 0], sizes = [1, 4], strides = [1, 1]} : vector<7x32xf32> to vector<1x4xf32>
    %60 = vector.broadcast %59 : vector<1x4xf32> to vector<8x4xf32>
    %61 = arith.addf %58, %60 : vector<8x4xf32>
    %c0_28 = arith.constant 0 : index
    %c0_29 = arith.constant 0 : index
    %62 = vector.load %arg10[%c0_28, %c0_29] : memref<8x4xf32, #tpu.memory_space<vmem>>, vector<8x4xf32>
    tpu.vector_store %arg10[%c0_28, %c0_29], %61 {strides = array<i32>} : memref<8x4xf32, #tpu.memory_space<vmem>>, vector<8x4xf32>,
    return
  }
  func.func @transform_0(%arg0: i32) -> (i32, i32) {
    %c0_i32 = arith.constant 0 : i32
    %c0_i32_0 = arith.constant 0 : i32
    return %arg0, %c0_i32 : i32, i32
  }
  func.func @transform_1(%arg0: i32) -> (i32, i32) {
    %c0_i32 = arith.constant 0 : i32
    %c0_i32_0 = arith.constant 0 : i32
    return %arg0, %c0_i32 : i32, i32
  }
  func.func @transform_2(%arg0: i32) -> (i32, i32) {
    %c0_i32 = arith.constant 0 : i32
    %c0_i32_0 = arith.constant 0 : i32
    %c0_i32_1 = arith.constant 0 : i32
    return %c0_i32, %c0_i32_0 : i32, i32
  }
  func.func @transform_3(%arg0: i32) -> (i32, i32) {
    %c0_i32 = arith.constant 0 : i32
    %c0_i32_0 = arith.constant 0 : i32
    %c0_i32_1 = arith.constant 0 : i32
    return %c0_i32, %c0_i32_0 : i32, i32
  }
  func.func @transform_4(%arg0: i32) -> (i32, i32) {
    %c0_i32 = arith.constant 0 : i32
    %c0_i32_0 = arith.constant 0 : i32
    %c0_i32_1 = arith.constant 0 : i32
    return %c0_i32, %c0_i32_0 : i32, i32
  }
  func.func @transform_5(%arg0: i32) -> (i32, i32) {
    %c0_i32 = arith.constant 0 : i32
    %c0_i32_0 = arith.constant 0 : i32
    %c0_i32_1 = arith.constant 0 : i32
    return %c0_i32, %c0_i32_0 : i32, i32
  }
  func.func @transform_6(%arg0: i32) -> (i32, i32) {
    %c0_i32 = arith.constant 0 : i32
    %c0_i32_0 = arith.constant 0 : i32
    %c0_i32_1 = arith.constant 0 : i32
    return %c0_i32, %c0_i32_0 : i32, i32
  }
  func.func @transform_7(%arg0: i32) -> (i32, i32, i32) {
    %c0_i32 = arith.constant 0 : i32
    %c0_i32_0 = arith.constant 0 : i32
    %c0_i32_1 = arith.constant 0 : i32
    %c0_i32_2 = arith.constant 0 : i32
    return %c0_i32, %c0_i32_0, %c0_i32_1 : i32, i32, i32
  }
  func.func @transform_8(%arg0: i32) -> (i32, i32) {
    %c0_i32 = arith.constant 0 : i32
    %c0_i32_0 = arith.constant 0 : i32
    %c0_i32_1 = arith.constant 0 : i32
    return %c0_i32, %c0_i32_0 : i32, i32
  }
  func.func @transform_9(%arg0: i32) -> (i32, i32) {
    %c0_i32 = arith.constant 0 : i32
    %c0_i32_0 = arith.constant 0 : i32
    return %arg0, %c0_i32 : i32, i32
  }
}

</mosaic_0001>

<llo_original>
// kernel: forward.1
$region0: #{forward.1}
  #allocation0 [shape = 'u32[]', space=smem, size = 0x4, offset = 0x4, fixed_abs, tag = 'smem constant byte address 0x4 - core index']
  #allocation1 [shape = 'u32[144,128]{1,0:T(1,128)}', space=vmem, size = 0x12000, scoped, tag = 'internal scratch']
  %s0 = inlined_call_operand.vmem [shape: f32[8,8], index: 0, kind: input, shape index: {}]
  %s1 = inlined_call_operand.vmem [shape: f32[8,1], index: 1, kind: input, shape index: {}]
  %s2 = inlined_call_operand.hbm [shape: f32[7,32], index: 2, kind: input, shape index: {}]
  %s3 = inlined_call_operand.vmem [shape: bf16[32,32], index: 3, kind: input, shape index: {}]
  %s4 = inlined_call_operand.vmem [shape: bf16[32,32], index: 4, kind: input, shape index: {}]
  %s5 = inlined_call_operand.hbm [shape: bf16[8,32], index: 5, kind: input, shape index: {}]
  %s6 = inlined_call_operand.hbm [shape: bf16[32,32], index: 6, kind: input, shape index: {}]
  %s7 = inlined_call_operand.vmem [shape: bf16[1,32,32], index: 7, kind: input, shape index: {}]
  %s8 = inlined_call_operand.vmem [shape: bf16[32,4], index: 8, kind: input, shape index: {}]
  %s9 = inlined_call_operand.vmem [shape: f32[8,4], index: 9, kind: output, shape index: {}]
  %s10 = sld [smem:[#allocation0]]
  $region58: #{forward.1} parent=0
    _
  %s12 = ssub.s32 1, %s10
  %s13 = scalar_select 0, %s12, %s10
  $region1: #{forward.1} parent=0
    #allocation2 [shape = 'u8[4096]{0}', space=vmem, size = 0x1000, scoped, tag = 'input window, operand 2, single buffered']
    #allocation3 [shape = 's32[1]{0}', space=sflag, size = 0x4, scoped, tag = 'scoped memory for forward.1']
    #allocation4 [shape = 'u8[2048]{0}', space=vmem, size = 0x800, scoped, tag = 'input window, operand 5, single buffered']
    #allocation5 [shape = 's32[1]{0}', space=sflag, size = 0x4, scoped, tag = 'scoped memory for forward.1']
    #allocation6 [shape = 'u8[8192]{0}', space=vmem, size = 0x2000, scoped, tag = 'input window, operand 6, single buffered']
    %14 = vsyncpa [#allocation3], 0
    %15 = vsyncpa [#allocation5], 0
    // Predicated region
    $region2: #{forward.1} parent=1 // pred_check
      _
    $region3: #{forward.1} parent=1 // pred_check_branch
      %17 = sbr.rel (0) target = $region5
    $region4: #{forward.1} parent=1 // pred_region
      _
    $region5: #{forward.1} parent=1 // pred_fallthru
      _
    // Predicated region
    $region6: #{forward.1} parent=1 // pred_check
      _
    $region7: #{forward.1} parent=1 // pred_check_branch
      %19 = sbr.rel (0) target = $region9
    $region8: #{forward.1} parent=1 // pred_region
      _
    $region9: #{forward.1} parent=1 // pred_fallthru
      _
    // Predicated region
    $region10: #{forward.1} parent=1 // pred_check
      _
    $region11: #{forward.1} parent=1 // pred_check_branch
      %21 = sbr.rel (0) target = $region13
    $region12: #{forward.1} parent=1 // pred_region
      %s23 = ssub.s32 128, 128
      %24 = vsyncadd [#allocation3], %s23
      %s26 = sshll.u32 [#allocation2], 4
      %s27 = int_to_ptr.vmem [resolvable:$true] %s26
      %29 = dma.hbm_to_vmem [thread:$0]  %s2, 128, %s27, [#allocation3]
    $region13: #{forward.1} parent=1 // pred_fallthru
      _
    // Predicated region
    $region14: #{forward.1} parent=1 // pred_check
      _
    $region15: #{forward.1} parent=1 // pred_check_branch
      %31 = sbr.rel (0) target = $region17
    $region16: #{forward.1} parent=1 // pred_region
      _
    $region17: #{forward.1} parent=1 // pred_fallthru
      _
    // Predicated region
    $region18: #{forward.1} parent=1 // pred_check
      _
    $region19: #{forward.1} parent=1 // pred_check_branch
      %33 = sbr.rel (0) target = $region21
    $region20: #{forward.1} parent=1 // pred_region
      _
    $region21: #{forward.1} parent=1 // pred_fallthru
      _
    // Predicated region
    $region22: #{forward.1} parent=1 // pred_check
      _
    $region23: #{forward.1} parent=1 // pred_check_branch
      %35 = sbr.rel (0) target = $region25
    $region24: #{forward.1} parent=1 // pred_region
      %s37 = ssub.s32 64, 64
      %38 = vsyncadd [#allocation5], %s37
      %s40 = sshll.u32 [#allocation4], 4
      %s41 = int_to_ptr.vmem [resolvable:$true] %s40
      %43 = dma.hbm_to_vmem [thread:$0]  %s5, 64, %s41, [#allocation5]
    $region25: #{forward.1} parent=1 // pred_fallthru
      _
    // Predicated region
    $region26: #{forward.1} parent=1 // pred_check
      _
    $region27: #{forward.1} parent=1 // pred_check_branch
      %45 = sbr.rel (0) target = $region29
    $region28: #{forward.1} parent=1 // pred_region
      %s47 = ssub.s32 256, 256
      %48 = vsyncadd [#allocation5], %s47
      %s49 = sshll.u32 [#allocation6], 4
      %s50 = int_to_ptr.vmem [resolvable:$true] %s49
      %55 = dma.hbm_to_vmem [thread:$0]  %s6, 256, %s50, [#allocation5], 64, 64, 4
    $region29: #{forward.1} parent=1 // pred_fallthru
      _
    // Predicated region
    $region30: #{forward.1} parent=1 // pred_check
      _
    $region31: #{forward.1} parent=1 // pred_check_branch
      %57 = sbr.rel (0) target = $region33
    $region32: #{forward.1} parent=1 // pred_region
      _
    $region33: #{forward.1} parent=1 // pred_fallthru
      _
    // Predicated region
    $region34: #{forward.1} parent=1 // pred_check
      _
    $region35: #{forward.1} parent=1 // pred_check_branch
      %59 = sbr.rel (0) target = $region37
    $region36: #{forward.1} parent=1 // pred_region
      _
    $region37: #{forward.1} parent=1 // pred_fallthru
      _
    // Predicated region
    $region38: #{forward.1} parent=1 // pred_check
      _
    $region39: #{forward.1} parent=1 // pred_check_branch
      %61 = sbr.rel (0) target = $region41
    $region40: #{forward.1} parent=1 // pred_region
      %62 = dma.done [#allocation3], 128
    $region41: #{forward.1} parent=1 // pred_fallthru
      _
    // Predicated region
    $region42: #{forward.1} parent=1 // pred_check
      _
    $region43: #{forward.1} parent=1 // pred_check_branch
      %64 = sbr.rel (0) target = $region45
    $region44: #{forward.1} parent=1 // pred_region
      %65 = dma.done [#allocation5], 64
    $region45: #{forward.1} parent=1 // pred_fallthru
      _
    // Predicated region
    $region46: #{forward.1} parent=1 // pred_check
      _
    $region47: #{forward.1} parent=1 // pred_check_branch
      %67 = sbr.rel (0) target = $region49
    $region48: #{forward.1} parent=1 // pred_region
      %68 = dma.done [#allocation5], 256
    $region49: #{forward.1} parent=1 // pred_fallthru
      _
    %v70 = vld [vmem:[#allocation2] sm:$0x7f]
    %v71 = vld [vmem:[%s1] sm:$0xff]
    %73 = vset.pattern.permute.xlu0 0
    %74 = vperm.xlu0 %73, %v71
    %v75 = vpop.permute.xlu0 %74
    %v77 = vlaneseq
    %v78 = vshrl.u32 %v77, 7
    %v79 = vsub.s32 0, %v78
    %v80 = vrot.slane %v70, %v79
    %v81 = vmul.f32 %v75, %v80
    %v82 = vlaneseq
    %v83 = vshrl.u32 %v82, 7
    %v84 = vsub.s32 1, %v83
    %v85 = vrot.slane %v70, %v84
    %v86 = vadd.f32 %v81, %v85
    %v87 = vand.u32 2147483647, %v86
    %vm88 = vcmp.le.f32.partialorder %v87, 0.7853982
    %vm89 = vcmp.lt.s32.totalorder %v86, 0
    %v90 = vand.u32 %v86, 2139095040
    %v91 = vshrl.u32 %v90, 23
    %v92 = vsub.s32 %v91, 127
    %v93 = vand.u32 2147483647, %v86
    %v94 = vand.u32 %v93, 8388607
    %v95 = vor.u32 %v94, 8388608
    %v96 = vsub.s32 0, %v95
    %v97 = vadd.s32 %v92, 1
    %vm98 = vcmp.gt.s32.totalorder %v97, 0
    %v99 = vsel %vm98, %v97, 0
    %v100 = vshrl.u32 %v99, 5
    %v101 = vand.u32 %v99, 31
    %v102 = vsub.s32 32, %v101
    %v103 = vshrl.u32 683565275, %v102
    %v104 = vshll.u32 683565275, %v101
    %v105 = vshrl.u32 2475754826, %v102
    %v106 = vor.u32 %v104, %v105
    %v107 = vshll.u32 2475754826, %v101
    %v108 = vshrl.u32 2131351028, %v102
    %v109 = vor.u32 %v107, %v108
    %v110 = vshll.u32 2131351028, %v101
    %v111 = vshrl.u32 2102212464, %v102
    %v112 = vor.u32 %v110, %v111
    %v113 = vshll.u32 2102212464, %v101
    %v114 = vshrl.u32 920167782, %v102
    %v115 = vor.u32 %v113, %v114
    %v116 = vshll.u32 920167782, %v101
    %v117 = vshrl.u32 1326507024, %v102
    %v118 = vor.u32 %v116, %v117
    %vm119 = vcmp.lt.s32.totalorder %v100, 1
    %vm120 = vcmp.lt.s32.totalorder %v100, 2
    %vm121 = vcmp.lt.s32.totalorder %v100, 3
    %vm122 = vcmp.lt.s32.totalorder %v100, 4
    %v123 = vsel %vm119, %v103, %v106
    %v124 = vsel %vm122, %v112, 2102212464
    %v125 = vsel %vm121, %v109, %v124
    %v126 = vsel %vm120, %v123, %v125
    %v127 = vsel %vm119, %v106, %v109
    %v128 = vsel %vm122, %v115, 920167782
    %v129 = vsel %vm121, %v112, %v128
    %v130 = vsel %vm120, %v127, %v129
    %v131 = vsel %vm119, %v109, %v112
    %v132 = vsel %vm122, %v118, 1326507024
    %v133 = vsel %vm121, %v115, %v132
    %v134 = vsel %vm120, %v131, %v133
    %v135 = vshll.u32 %v95, 8
    %v136 = vmul.u32.u64.compose %v135, %v134
    %v137 = vextract.low.u32 %v136
    %v138 = vextract.high.u32 %v136
    %v139 = vmul.u32.u64.compose %v135, %v130
    %v140 = vextract.low.u32 %v139
    %v141 = vextract.high.u32 %v139
    %v142 = vmul.u32 %v135, %v126
    %v143 = vadd.s32 %v138, %v140
    %vm144 = vc.u32 %v138, %v140
    %v145 = vadd.s32 %v141, 1
    %v146 = vsel %vm144, %v145, %v141
    %v147 = vadd.s32 %v142, %v146
    %v148 = vadd.s32 %v147, 536870912
    %v149 = vshrl.u32 %v148, 30
    %v150 = vshll.u32 %v149, 30
    %v151 = vsub.s32 %v147, %v150
    %vm152 = vcmp.lt.s32.totalorder %v151, 0
    %v153 = vsub.s32 0, %v151
    %v154 = vsel %vm152, %v153, %v151
    %v155 = vclz %v154
    %v156 = vsub.s32 %v155, 2
    %vm157 = vcmp.gt.s32.totalorder 0, %v156
    %v158 = vsel %vm157, 0, %v156
    %v159 = vsub.s32 32, %v158
    %v160 = vshll.u32 %v151, %v158
    %v161 = vshrl.u32 %v143, %v159
    %v162 = vor.u32 %v160, %v161
    %v163 = vsub.s32 4294967266, %v158
    %v164 = vadd.s32 %v163, 127
    %v165 = vshll.u32 %v164, 23
    %v166 = vor.u32 4788187, %v165
    %v167 = vand.u32 2147483647, %v166
    %v169 = vcvt.s32.f32 %v162
    %v170 = vmul.f32 %v169, %v167
    %v171 = vxor.u32 %v170, 2147483648
    %v172 = vsel %vm89, %v171, %v170
    %v173 = vsub.s32 4, %v149
    %v174 = vsel %vm89, %v173, %v149
    %v175 = vsel %vm88, %v86, %v172
    %v176 = vsel %vm88, 0, %v174
    %v177 = vcosq.f32.pop %v175
    %v178 = vsinq.f32.pop %v175
    %vm179 = vweird.f32 %v86
    %v180 = vand.u32 %v176, 3
    %vm181 = vcmp.lt.s32.totalorder %v180, 2
    %vm182 = vcmp.eq.s32.totalorder %v180, 0
    %v183 = vxor.u32 %v178, 2147483648
    %v184 = vsel %vm182, %v177, %v183
    %vm185 = vcmp.eq.s32.totalorder %v180, 2
    %v186 = vxor.u32 %v177, 2147483648
    %v187 = vsel %vm185, %v186, %v178
    %v188 = vsel %vm181, %v184, %v187
    %v189 = vsel %vm179, nan, %v188
    %v190 = vpack.c.bf16 %v189, %v189
    %v191 = vld [vmem:[%s3] sm:$0xf]
    %v192 = vld [vmem:[%s3 + $0x4] sm:$0xf]
    %v193 = vld [vmem:[%s3 + $0x8] sm:$0xf]
    %v194 = vld [vmem:[%s3 + $0xc] sm:$0xf]
    %v195 = vlaneseq
    %v196 = vshrl.u32 %v195, 7
    %v197 = vsub.s32 2, %v196
    %v198 = vrot.slane %v70, %v197
    %v203 = vunpack.c.l.b16 %v191
    %v204 = vunpack.c.l.b16 %v192
    %v205 = vunpack.c.l.b16 %v193
    %v206 = vunpack.c.l.b16 %v194
    %v207 = vpack.c.b16 %v204, %v203
    %v208 = vpack.c.b16 %v206, %v205
    %vm211 = vcmask 261120
    %v213 = vsel %vm211, %v190, 0
    %215 = vmatprep.subr.bf16.mxu0 0
    %216 = vmatpush1.bf16.msra.mxu0 0
    %217 = vmatprep.subr.bf16.mxu0 0
    %218 = vmatpush1.bf16.msra.mxu0 0
    %219 = vmatprep.subr.bf16.mxu0 0
    %220 = vmatpush1.bf16.msra.mxu0 0
    %221 = vmatprep.subr.bf16.mxu0 0
    %222 = vmatpush1.bf16.msra.mxu0 0
    %223 = vmatprep.subr.bf16.mxu0 0
    %224 = vmatpush1.bf16.msra.mxu0 0
    %225 = vmatprep.subr.bf16.mxu0 0
    %226 = vmatpush1.bf16.msra.mxu0 0
    %227 = vmatprep.subr.bf16.mxu0 0
    %228 = vmatpush1.bf16.msra.mxu0 %v208
    %229 = vmatprep.subr.bf16.mxu0 0
    %230 = vmatpush1.bf16.msra.mxu0 %v207
    %231 = vmatprep.subr.bf16.mxu0 0
    %232 = vmatpush2.bf16.msra.mxu0 0
    %233 = vmatprep.subr.bf16.mxu0 0
    %234 = vmatpush2.bf16.msra.mxu0 0
    %235 = vmatprep.subr.bf16.mxu0 0
    %236 = vmatpush2.bf16.msra.mxu0 0
    %237 = vmatprep.subr.bf16.mxu0 0
    %238 = vmatpush2.bf16.msra.mxu0 0
    %239 = vmatprep.subr.bf16.mxu0 0
    %240 = vmatpush2.bf16.msra.mxu0 0
    %241 = vmatprep.subr.bf16.mxu0 0
    %242 = vmatpush2.bf16.msra.mxu0 0
    %243 = vmatprep.subr.bf16.mxu0 0
    %244 = vmatpush2.bf16.msra.mxu0 0
    %245 = vmatprep.subr.bf16.mxu0 0
    %246 = vmatpush2.bf16.msra.mxu0 0
    %247 = vmatprep.mubr.bf16.mxu0 0
    %248 = vmatmul.mubr.bf16.gmra.mxu0 %v213
    %v249 = vpop.f32.mrf.mxu0
    %v250 = vadd.f32 %v198, %v249
    %v251 = vpop.f32.mrf.mxu0
    %v252 = vpop.f32.mrf.mxu0
    %v253 = vpop.f32.mrf.mxu0
    %254 = vdwg.mxu0
    %v255 = vxor.u32 %v250, 2147483648
    %v256 = vmul.f32 %v255, 1.442695
    %v257 = vpow.pop %v256
    %v258 = vadd.f32 %v257, 1.0
    %v259 = vrcp.pop %v258
    %v260 = vmul.f32 1.0, %v259
    %v261 = vmul.f32 %v250, %v260
    %v262 = vpack.c.bf16 %v261, %v261
    %v263 = vld [vmem:[%s4] sm:$0xf]
    %v264 = vld [vmem:[%s4 + $0x4] sm:$0xf]
    %v265 = vld [vmem:[%s4 + $0x8] sm:$0xf]
    %v266 = vld [vmem:[%s4 + $0xc] sm:$0xf]
    %v267 = vlaneseq
    %v268 = vshrl.u32 %v267, 7
    %v269 = vsub.s32 3, %v268
    %v270 = vrot.slane %v70, %v269
    %v275 = vunpack.c.l.b16 %v263
    %v276 = vunpack.c.l.b16 %v264
    %v277 = vunpack.c.l.b16 %v265
    %v278 = vunpack.c.l.b16 %v266
    %v279 = vpack.c.b16 %v276, %v275
    %v280 = vpack.c.b16 %v278, %v277
    %v284 = vsel %vm211, %v262, 0
    %286 = vmatprep.subr.bf16.mxu0 0
    %287 = vmatpush1.bf16.msra.mxu0 0
    %288 = vmatprep.subr.bf16.mxu0 0
    %289 = vmatpush1.bf16.msra.mxu0 0
    %290 = vmatprep.subr.bf16.mxu0 0
    %291 = vmatpush1.bf16.msra.mxu0 0
    %292 = vmatprep.subr.bf16.mxu0 0
    %293 = vmatpush1.bf16.msra.mxu0 0
    %294 = vmatprep.subr.bf16.mxu0 0
    %295 = vmatpush1.bf16.msra.mxu0 0
    %296 = vmatprep.subr.bf16.mxu0 0
    %297 = vmatpush1.bf16.msra.mxu0 0
    %298 = vmatprep.subr.bf16.mxu0 0
    %299 = vmatpush1.bf16.msra.mxu0 %v280
    %300 = vmatprep.subr.bf16.mxu0 0
    %301 = vmatpush1.bf16.msra.mxu0 %v279
    %302 = vmatprep.subr.bf16.mxu0 0
    %303 = vmatpush2.bf16.msra.mxu0 0
    %304 = vmatprep.subr.bf16.mxu0 0
    %305 = vmatpush2.bf16.msra.mxu0 0
    %306 = vmatprep.subr.bf16.mxu0 0
    %307 = vmatpush2.bf16.msra.mxu0 0
    %308 = vmatprep.subr.bf16.mxu0 0
    %309 = vmatpush2.bf16.msra.mxu0 0
    %310 = vmatprep.subr.bf16.mxu0 0
    %311 = vmatpush2.bf16.msra.mxu0 0
    %312 = vmatprep.subr.bf16.mxu0 0
    %313 = vmatpush2.bf16.msra.mxu0 0
    %314 = vmatprep.subr.bf16.mxu0 0
    %315 = vmatpush2.bf16.msra.mxu0 0
    %316 = vmatprep.subr.bf16.mxu0 0
    %317 = vmatpush2.bf16.msra.mxu0 0
    %318 = vmatprep.mubr.bf16.mxu0 0
    %319 = vmatmul.mubr.bf16.gmra.mxu0 %v284
    %v320 = vpop.f32.mrf.mxu0
    %v321 = vadd.f32 %v270, %v320
    %v322 = vpop.f32.mrf.mxu0
    %v323 = vpop.f32.mrf.mxu0
    %v324 = vpop.f32.mrf.mxu0
    %325 = vdwg.mxu0
    %v326 = vld [vmem:[%s0] sm:$0xff]
    %v327 = vpack.c.bf16 %v326, %v326
    %v328 = vld [vmem:[#allocation4] sm:$0xf]
    %v329 = vpack.c.bf16 %v321, %v321
    %v330 = vld [vmem:[#allocation6] sm:$0xf]
    %v331 = vld [vmem:[#allocation6 + $0x4] sm:$0xf]
    %v332 = vld [vmem:[#allocation6 + $0x8] sm:$0xf]
    %v333 = vld [vmem:[#allocation6 + $0xc] sm:$0xf]
    %v338 = vunpack.c.l.b16 %v330
    %v339 = vunpack.c.l.b16 %v331
    %v340 = vunpack.c.l.b16 %v332
    %v341 = vunpack.c.l.b16 %v333
    %v342 = vpack.c.b16 %v339, %v338
    %v343 = vpack.c.b16 %v341, %v340
    %v347 = vsel %vm211, %v329, 0
    %349 = vmatprep.subr.bf16.mxu0 0
    %350 = vmatpush1.bf16.msra.mxu0 0
    %351 = vmatprep.subr.bf16.mxu0 0
    %352 = vmatpush1.bf16.msra.mxu0 0
    %353 = vmatprep.subr.bf16.mxu0 0
    %354 = vmatpush1.bf16.msra.mxu0 0
    %355 = vmatprep.subr.bf16.mxu0 0
    %356 = vmatpush1.bf16.msra.mxu0 0
    %357 = vmatprep.subr.bf16.mxu0 0
    %358 = vmatpush1.bf16.msra.mxu0 0
    %359 = vmatprep.subr.bf16.mxu0 0
    %360 = vmatpush1.bf16.msra.mxu0 0
    %361 = vmatprep.subr.bf16.mxu0 0
    %362 = vmatpush1.bf16.msra.mxu0 %v343
    %363 = vmatprep.subr.bf16.mxu0 0
    %364 = vmatpush1.bf16.msra.mxu0 %v342
    %365 = vmatprep.subr.bf16.mxu0 0
    %366 = vmatpush2.bf16.msra.mxu0 0
    %367 = vmatprep.subr.bf16.mxu0 0
    %368 = vmatpush2.bf16.msra.mxu0 0
    %369 = vmatprep.subr.bf16.mxu0 0
    %370 = vmatpush2.bf16.msra.mxu0 0
    %371 = vmatprep.subr.bf16.mxu0 0
    %372 = vmatpush2.bf16.msra.mxu0 0
    %373 = vmatprep.subr.bf16.mxu0 0
    %374 = vmatpush2.bf16.msra.mxu0 0
    %375 = vmatprep.subr.bf16.mxu0 0
    %376 = vmatpush2.bf16.msra.mxu0 0
    %377 = vmatprep.subr.bf16.mxu0 0
    %378 = vmatpush2.bf16.msra.mxu0 0
    %379 = vmatprep.subr.bf16.mxu0 0
    %380 = vmatpush2.bf16.msra.mxu0 0
    %381 = vmatprep.mubr.bf16.mxu0 0
    %382 = vmatmul.mubr.bf16.gmra.mxu0 %v347
    %v383 = vpop.f32.mrf.mxu0
    %v384 = vadd.f32 0.0, %v383
    %v385 = vpop.f32.mrf.mxu0
    %v386 = vpop.f32.mrf.mxu0
    %v387 = vpop.f32.mrf.mxu0
    %388 = vdwg.mxu0
    %vm389 = vcmask 64512
    %v391 = vsel %vm389, %v327, 0
    %vm393 = vcmask 1043456
    %v395 = vsel %vm393, %v328, 0
    %397 = vmatprep.subr.bf16.mxu0 0
    %398 = vmatpush1.bf16.msra.mxu0 0
    %399 = vmatprep.subr.bf16.mxu0 0
    %400 = vmatpush1.bf16.msra.mxu0 0
    %401 = vmatprep.subr.bf16.mxu0 0
    %402 = vmatpush1.bf16.msra.mxu0 0
    %403 = vmatprep.subr.bf16.mxu0 0
    %404 = vmatpush1.bf16.msra.mxu0 0
    %405 = vmatprep.subr.bf16.mxu0 0
    %406 = vmatpush1.bf16.msra.mxu0 0
    %407 = vmatprep.subr.bf16.mxu0 0
    %408 = vmatpush1.bf16.msra.mxu0 0
    %409 = vmatprep.subr.bf16.mxu0 0
    %410 = vmatpush1.bf16.msra.mxu0 0
    %411 = vmatprep.subr.bf16.mxu0 0
    %412 = vmatpush1.bf16.msra.mxu0 %v395
    %413 = vmatprep.subr.bf16.mxu0 0
    %414 = vmatpush2.bf16.msra.mxu0 0
    %415 = vmatprep.subr.bf16.mxu0 0
    %416 = vmatpush2.bf16.msra.mxu0 0
    %417 = vmatprep.subr.bf16.mxu0 0
    %418 = vmatpush2.bf16.msra.mxu0 0
    %419 = vmatprep.subr.bf16.mxu0 0
    %420 = vmatpush2.bf16.msra.mxu0 0
    %421 = vmatprep.subr.bf16.mxu0 0
    %422 = vmatpush2.bf16.msra.mxu0 0
    %423 = vmatprep.subr.bf16.mxu0 0
    %424 = vmatpush2.bf16.msra.mxu0 0
    %425 = vmatprep.subr.bf16.mxu0 0
    %426 = vmatpush2.bf16.msra.mxu0 0
    %427 = vmatprep.subr.bf16.mxu0 0
    %428 = vmatpush2.bf16.msra.mxu0 0
    %429 = vmatprep.mubr.bf16.mxu0 0
    %430 = vmatmul.mubr.bf16.gmra.mxu0 %v391
    %v431 = vpop.f32.mrf.mxu0
    %v432 = vadd.f32 %v384, %v431
    %v433 = vpop.f32.mrf.mxu0
    %v434 = vpop.f32.mrf.mxu0
    %v435 = vpop.f32.mrf.mxu0
    %436 = vdwg.mxu0
    %v437 = vlaneseq
    %v438 = vshrl.u32 %v437, 7
    %v439 = vsub.s32 4, %v438
    %v440 = vrot.slane %v70, %v439
    %v441 = vadd.f32 %v432, %v440
    %vm442 = vcmp.ge.f32.partialorder %v441, 0.0
    %v443 = vmul.f32 %v441, 0.01
    %v444 = vsel %vm442, %v441, %v443
    %v445 = vld [vmem:[%s7] sm:$0xf]
    %v446 = vld [vmem:[%s7 + $0x4] sm:$0xf]
    %v447 = vld [vmem:[%s7 + $0x8] sm:$0xf]
    %v448 = vld [vmem:[%s7 + $0xc] sm:$0xf]
    %v449 = vpack.c.bf16 %v444, %v444
    %v450 = vlaneseq
    %v451 = vshrl.u32 %v450, 7
    %v452 = vsub.s32 5, %v451
    %v453 = vrot.slane %v70, %v452
    %v458 = vunpack.c.l.b16 %v445
    %v459 = vunpack.c.l.b16 %v446
    %v460 = vunpack.c.l.b16 %v447
    %v461 = vunpack.c.l.b16 %v448
    %v462 = vpack.c.b16 %v459, %v458
    %v463 = vpack.c.b16 %v461, %v460
    %v467 = vsel %vm211, %v449, 0
    %469 = vmatprep.subr.bf16.mxu0 0
    %470 = vmatpush1.bf16.msra.mxu0 0
    %471 = vmatprep.subr.bf16.mxu0 0
    %472 = vmatpush1.bf16.msra.mxu0 0
    %473 = vmatprep.subr.bf16.mxu0 0
    %474 = vmatpush1.bf16.msra.mxu0 0
    %475 = vmatprep.subr.bf16.mxu0 0
    %476 = vmatpush1.bf16.msra.mxu0 0
    %477 = vmatprep.subr.bf16.mxu0 0
    %478 = vmatpush1.bf16.msra.mxu0 0
    %479 = vmatprep.subr.bf16.mxu0 0
    %480 = vmatpush1.bf16.msra.mxu0 0
    %481 = vmatprep.subr.bf16.mxu0 0
    %482 = vmatpush1.bf16.msra.mxu0 %v463
    %483 = vmatprep.subr.bf16.mxu0 0
    %484 = vmatpush1.bf16.msra.mxu0 %v462
    %485 = vmatprep.subr.bf16.mxu0 0
    %486 = vmatpush2.bf16.msra.mxu0 0
    %487 = vmatprep.subr.bf16.mxu0 0
    %488 = vmatpush2.bf16.msra.mxu0 0
    %489 = vmatprep.subr.bf16.mxu0 0
    %490 = vmatpush2.bf16.msra.mxu0 0
    %491 = vmatprep.subr.bf16.mxu0 0
    %492 = vmatpush2.bf16.msra.mxu0 0
    %493 = vmatprep.subr.bf16.mxu0 0
    %494 = vmatpush2.bf16.msra.mxu0 0
    %495 = vmatprep.subr.bf16.mxu0 0
    %496 = vmatpush2.bf16.msra.mxu0 0
    %497 = vmatprep.subr.bf16.mxu0 0
    %498 = vmatpush2.bf16.msra.mxu0 0
    %499 = vmatprep.subr.bf16.mxu0 0
    %500 = vmatpush2.bf16.msra.mxu0 0
    %501 = vmatprep.mubr.bf16.mxu0 0
    %502 = vmatmul.mubr.bf16.gmra.mxu0 %v467
    %v503 = vpop.f32.mrf.mxu0
    %v504 = vadd.f32 %v453, %v503
    %v505 = vpop.f32.mrf.mxu0
    %v506 = vpop.f32.mrf.mxu0
    %v507 = vpop.f32.mrf.mxu0
    %508 = vdwg.mxu0
    %vm509 = vcmp.ge.f32.partialorder %v504, 0.0
    %v510 = vmul.f32 %v504, 0.01
    %v511 = vsel %vm509, %v504, %v510
    %v512 = vpack.c.bf16 %v511, %v511
    %v513 = vld [vmem:[%s8] sm:$0xf]
    %v514 = vld [vmem:[%s8 + $0x4] sm:$0xf]
    %v515 = vld [vmem:[%s8 + $0x8] sm:$0xf]
    %v516 = vld [vmem:[%s8 + $0xc] sm:$0xf]
    %v517 = vlaneseq
    %v518 = vshrl.u32 %v517, 7
    %v519 = vsub.s32 6, %v518
    %v520 = vrot.slane %v70, %v519
    %v525 = vunpack.c.l.b16 %v513
    %v526 = vunpack.c.l.b16 %v514
    %v527 = vunpack.c.l.b16 %v515
    %v528 = vunpack.c.l.b16 %v516
    %v529 = vpack.c.b16 %v526, %v525
    %v530 = vpack.c.b16 %v528, %v527
    %v534 = vsel %vm211, %v512, 0
    %536 = vmatprep.subr.bf16.mxu0 0
    %537 = vmatpush1.bf16.msra.mxu0 0
    %538 = vmatprep.subr.bf16.mxu0 0
    %539 = vmatpush1.bf16.msra.mxu0 0
    %540 = vmatprep.subr.bf16.mxu0 0
    %541 = vmatpush1.bf16.msra.mxu0 0
    %542 = vmatprep.subr.bf16.mxu0 0
    %543 = vmatpush1.bf16.msra.mxu0 0
    %544 = vmatprep.subr.bf16.mxu0 0
    %545 = vmatpush1.bf16.msra.mxu0 0
    %546 = vmatprep.subr.bf16.mxu0 0
    %547 = vmatpush1.bf16.msra.mxu0 0
    %548 = vmatprep.subr.bf16.mxu0 0
    %549 = vmatpush1.bf16.msra.mxu0 %v530
    %550 = vmatprep.subr.bf16.mxu0 0
    %551 = vmatpush1.bf16.msra.mxu0 %v529
    %552 = vmatprep.subr.bf16.mxu0 0
    %553 = vmatpush2.bf16.msra.mxu0 0
    %554 = vmatprep.subr.bf16.mxu0 0
    %555 = vmatpush2.bf16.msra.mxu0 0
    %556 = vmatprep.subr.bf16.mxu0 0
    %557 = vmatpush2.bf16.msra.mxu0 0
    %558 = vmatprep.subr.bf16.mxu0 0
    %559 = vmatpush2.bf16.msra.mxu0 0
    %560 = vmatprep.subr.bf16.mxu0 0
    %561 = vmatpush2.bf16.msra.mxu0 0
    %562 = vmatprep.subr.bf16.mxu0 0
    %563 = vmatpush2.bf16.msra.mxu0 0
    %564 = vmatprep.subr.bf16.mxu0 0
    %565 = vmatpush2.bf16.msra.mxu0 0
    %566 = vmatprep.subr.bf16.mxu0 0
    %567 = vmatpush2.bf16.msra.mxu0 0
    %568 = vmatprep.mubr.bf16.mxu0 0
    %569 = vmatmul.mubr.bf16.gmra.mxu0 %v534
    %v570 = vpop.f32.mrf.mxu0
    %v571 = vadd.f32 %v520, %v570
    %v572 = vpop.f32.mrf.mxu0
    %v573 = vpop.f32.mrf.mxu0
    %v574 = vpop.f32.mrf.mxu0
    %575 = vdwg.mxu0
    %vm576 = vcmask 31744
    %577 = vst.msk [vmem:[%s9] sm:$0xff] %vm576, %v571
    // Predicated region
    $region50: #{forward.1} parent=1 // pred_check
      _
    $region51: #{forward.1} parent=1 // pred_check_branch
      %579 = sbr.rel (0) target = $region53
    $region52: #{forward.1} parent=1 // pred_region
      _
    $region53: #{forward.1} parent=1 // pred_fallthru
      _
    // Predicated region
    $region54: #{forward.1} parent=1 // pred_check
      _
    $region55: #{forward.1} parent=1 // pred_check_branch
      %581 = sbr.rel (0) target = $region57
    $region56: #{forward.1} parent=1 // pred_region
      _
    $region57: #{forward.1} parent=1 // pred_fallthru
      _
    %582 = vsyncpa [#allocation3], 1
    %583 = vsyncpa [#allocation5], 1

</llo_original>
